<compile_context>
chip_gen: v7x
topology: tpu7x:2x2x1
jax: 0.10.0
libtpu: 0.0.40
codegen_flags: <defaults>
</compile_context>

<pallas_src>
from typing import Any, NamedTuple

import jax
import jax.numpy as jnp
from jax.experimental import pallas as pl
from jax.experimental.pallas import tpu as pltpu

NEG_SLOPE = 0.01  # torch.nn.LeakyReLU default
LANES = 128       # TPU vreg lane width
SUBLANES = 8      # f32 sublanes per vreg

# Row layout of the packed (8, Hp) vector table (one f32 vreg tile).
_ROW_W1, _ROW_B1, _ROW_B2, _ROW_W3S, _ROW_B3, _ROW_W4, _ROW_B4 = range(7)
_NUM_VEC_ROWS = SUBLANES


def _leaky(x):
    return jnp.where(x > 0, x, NEG_SLOPE * x)


def _pad_cols(a, to):
    pad = to - a.shape[1]
    return a if pad == 0 else jnp.pad(a, ((0, 0), (0, pad)))


def _pad_rows(a, to):
    pad = to - a.shape[0]
    return a if pad == 0 else jnp.pad(a, ((0, pad), (0, 0)))


class PreparedParams(NamedTuple):
    vecs: Any          # (8, Hp) f32 packed row vectors
    w23: Any           # (2, Hp, Hp) f32 stacked [W2 ; W3[1:, :]]
    w1: Any = None     # (F, Hp) f32, only when F > 1 (else packed into vecs)


def prepare_params(params):
    """One-time packing/padding of the 8 torch Linear tensors (off the hot path).

    Padded hidden columns of every weight/bias are zero, so padded activations
    are exactly 0 after LeakyReLU and never perturb real outputs or the batch
    statistic (which only reads hidden column 0).
    """
    w1, b1, w2, b2, w3, b3, w4, b4 = params
    F, H = w1.shape
    Hp = ((H + LANES - 1) // LANES) * LANES   # hidden dim padded to 128 lanes

    def row(v):  # (1, k) -> (1, Hp) f32, zero-padded
        return _pad_cols(jnp.asarray(v, jnp.float32).reshape(1, -1), Hp)

    rows = [None] * _NUM_VEC_ROWS
    # w1 row only used by the kernel when F == 1 (VPU broadcast-multiply path).
    rows[_ROW_W1] = row(w1) if F == 1 else jnp.zeros((1, Hp), jnp.float32)
    rows[_ROW_B1] = row(b1)
    rows[_ROW_B2] = row(b2)
    rows[_ROW_W3S] = row(w3[0:1, :])          # W3 row 0 multiplies the std feature
    rows[_ROW_B3] = row(b3)
    rows[_ROW_W4] = row(w4.T)                 # (H, 1) -> (1, Hp)
    rows[_ROW_B4] = jnp.broadcast_to(          # scalar b4 filled across all lanes
        jnp.asarray(b4, jnp.float32).reshape(1, 1), (1, Hp))
    for i in range(_NUM_VEC_ROWS):
        if rows[i] is None:
            rows[i] = jnp.zeros((1, Hp), jnp.float32)
    vecs = jnp.concatenate(rows, axis=0)                        # (8, Hp)

    w2p = _pad_cols(_pad_rows(jnp.asarray(w2, jnp.float32), Hp), Hp)
    w3rp = _pad_cols(_pad_rows(jnp.asarray(w3[1:, :], jnp.float32), Hp), Hp)
    w23 = jnp.stack([w2p, w3rp], axis=0)                        # (2, Hp, Hp)

    w1p = None if F == 1 else _pad_cols(jnp.asarray(w1, jnp.float32), Hp)
    return PreparedParams(vecs=vecs, w23=w23, w1=w1p)


def _make_kernel(real_b, padded_b, w1_packed):
    def kernel(*refs):
        if w1_packed:
            x_ref, w23_ref, vecs_ref, o_ref = refs
            w1_ref = None
        else:
            x_ref, w1_ref, w23_ref, vecs_ref, o_ref = refs

        x = x_ref[...]                                # (Bp, F) f32
        vecs = vecs_ref[...]                          # (8, Hp) f32 — single load
        b1 = vecs[_ROW_B1:_ROW_B1 + 1, :]
        b2 = vecs[_ROW_B2:_ROW_B2 + 1, :]
        w3s = vecs[_ROW_W3S:_ROW_W3S + 1, :]
        b3 = vecs[_ROW_B3:_ROW_B3 + 1, :]
        w4r = vecs[_ROW_W4:_ROW_W4 + 1, :]
        b4 = vecs[_ROW_B4:_ROW_B4 + 1, :]

        # ---- D_in layer 1 ----
        if w1_packed:
            # F == 1: a K=1 matmul wastes the MXU contraction depth; do the
            # outer product as a VPU broadcast multiply instead.
            z1 = x * vecs[_ROW_W1:_ROW_W1 + 1, :] + b1
        else:
            z1 = jnp.dot(x, w1_ref[...], preferred_element_type=jnp.float32) + b1
        h1 = _leaky(z1)                               # (Bp, Hp) f32

        # ---- D_in layer 2: real HxH matmul -> MXU, f32 ----
        h2 = _leaky(jnp.dot(h1, w23_ref[0],
                            preferred_element_type=jnp.float32) + b2)

        # ---- batch statistic: unbiased std of hidden column 0 (two-pass,
        # kept as (1,1) arrays so everything stays in vregs / EUP). ----
        col0 = h2[:, 0:1]                             # (Bp, 1) f32
        if padded_b != real_b:
            valid = jax.lax.broadcasted_iota(jnp.int32, (padded_b, 1), 0) < real_b
            col0 = jnp.where(valid, col0, 0.0)
        mean = jnp.sum(col0, keepdims=True) / real_b  # (1,1)
        d = col0 - mean
        if padded_b != real_b:
            d = jnp.where(valid, d, 0.0)
        # Bessel correction; NaN at B == 1, matching torch.std.
        var = jnp.sum(d * d, keepdims=True) / (real_b - 1.0)
        std = jnp.sqrt(var)                           # (1,1)

        # ---- D_out layer 1: cat([std, h2]) @ W3 == std*W3[0:1,:] + h2 @ W3[1:,:]
        h3 = _leaky(jnp.dot(h2, w23_ref[1], preferred_element_type=jnp.float32)
                    + std * w3s + b3)                 # (Bp, Hp) f32

        # ---- D_out layer 2: N == 1 -> keep it off the MXU.
        # VPU multiply + XLU row-reduce; b4 is lane-broadcast so the store is an
        # unmasked lane-dense vst of (Bp, 128) with the result in every lane.
        out = jnp.sum(h3 * w4r, axis=1, keepdims=True)   # (Bp, 1)
        o_ref[...] = out + b4                            # (Bp, LANES)
    return kernel


@jax.jit
def batch_stat_discriminator(x, prep):
    """Forward pass; `prep` comes from prepare_params (one-time preprocessing)."""
    B, F = x.shape
    Bp = ((B + SUBLANES - 1) // SUBLANES) * SUBLANES   # full f32 sublanes
    x = x.astype(jnp.float32)
    if Bp != B:
        x = jnp.pad(x, ((0, Bp - B), (0, 0)))

    w1_packed = prep.w1 is None
    kernel = _make_kernel(real_b=B, padded_b=Bp, w1_packed=w1_packed)

    vmem = pl.BlockSpec(memory_space=pltpu.MemorySpace.VMEM)
    args = (x,) if w1_packed else (x, prep.w1)
    args = args + (prep.w23, prep.vecs)
    out = pl.pallas_call(
        kernel,
        out_shape=jax.ShapeDtypeStruct((Bp, LANES), jnp.float32),
        in_specs=[vmem] * len(args),
        out_specs=vmem,
    )(*args)
    # Consumers on a hot path can skip this slice and read lane 0 of the raw
    # (Bp, LANES) kernel output directly.
    return out[:B, :1]


def init_params(key, h_size, n_features=1):
    """Deterministic init mimicking torch.nn.Linear's U(-1/sqrt(fan_in), 1/sqrt(fan_in))."""
    def linear(k, fan_in, fan_out):
        kw, kb = jax.random.split(k)
        bound = 1.0 / jnp.sqrt(fan_in)
        w = jax.random.uniform(kw, (fan_in, fan_out), jnp.float32, -bound, bound)
        b = jax.random.uniform(kb, (1, fan_out), jnp.float32, -bound, bound)
        return w, b

    k1, k2, k3, k4 = jax.random.split(key, 4)
    w1, b1 = linear(k1, n_features, h_size)
    w2, b2 = linear(k2, h_size, h_size)
    w3, b3 = linear(k3, h_size + 1, h_size)
    w4, b4 = linear(k4, h_size, 1)
    return (w1, b1, w2, b2, w3, b3, w4, b4)


def reference_forward(x, params):
    """Pure-JAX f32 reference reproducing the PyTorch forward exactly."""
    w1, b1, w2, b2, w3, b3, w4, b4 = params
    h = _leaky(x @ w1 + b1)
    h = _leaky(h @ w2 + b2)
    std = jnp.std(h[:, 0:1], ddof=1)                       # torch.std -> unbiased
    std_col = jnp.broadcast_to(std.reshape(1, 1), (h.shape[0], 1))
    h = jnp.concatenate([std_col, h], axis=1)
    h = _leaky(h @ w3 + b3)
    return h @ w4 + b4


if __name__ == "__main__":
    B, n_features, h_size = 8, 1, 32
    key = jax.random.PRNGKey(0)
    kx, kp = jax.random.split(key)
    x = jax.random.normal(kx, (B, n_features), jnp.float32)
    params = init_params(kp, h_size, n_features)

    prep = prepare_params(params)   # one-time packing, off the per-call path
    out = batch_stat_discriminator(x, prep)
    out = jax.block_until_ready(out)
    assert out.shape == (B, 1)

    # Full-f32 kernel vs exact PyTorch-semantics f32 reference.
    ref = reference_forward(x, params)
    assert jnp.allclose(out, ref, atol=1e-4, rtol=1e-4), (out, ref)

    print("KERNEL_OK")
</pallas_src>

<mosaic_0001>
module attributes {stable_mosaic.version = 11 : i64} {
  func.func @kernel(%arg0: memref<8x1xf32, #tpu.memory_space<vmem>>, %arg1: memref<2x128x128xf32, #tpu.memory_space<vmem>>, %arg2: memref<8x128xf32, #tpu.memory_space<vmem>>, %arg3: memref<8x128xf32, #tpu.memory_space<vmem>>) attributes {dimension_semantics = [], scalar_prefetch = 0 : i64, scratch_operands = 0 : i64, tpu.core_type = #tpu.core_type<tc>} {
    %c0 = arith.constant 0 : index
    %c0_0 = arith.constant 0 : index
    %0 = vector.load %arg0[%c0, %c0_0] : memref<8x1xf32, #tpu.memory_space<vmem>>, vector<8x1xf32>
    %c0_1 = arith.constant 0 : index
    %c0_2 = arith.constant 0 : index
    %1 = vector.load %arg2[%c0_1, %c0_2] : memref<8x128xf32, #tpu.memory_space<vmem>>, vector<8x128xf32>
    %2 = vector.extract_strided_slice %1 {offsets = [1, 0], sizes = [1, 128], strides = [1, 1]} : vector<8x128xf32> to vector<1x128xf32>
    %3 = vector.extract_strided_slice %1 {offsets = [2, 0], sizes = [1, 128], strides = [1, 1]} : vector<8x128xf32> to vector<1x128xf32>
    %4 = vector.extract_strided_slice %1 {offsets = [3, 0], sizes = [1, 128], strides = [1, 1]} : vector<8x128xf32> to vector<1x128xf32>
    %5 = vector.extract_strided_slice %1 {offsets = [4, 0], sizes = [1, 128], strides = [1, 1]} : vector<8x128xf32> to vector<1x128xf32>
    %6 = vector.extract_strided_slice %1 {offsets = [5, 0], sizes = [1, 128], strides = [1, 1]} : vector<8x128xf32> to vector<1x128xf32>
    %7 = vector.extract_strided_slice %1 {offsets = [6, 0], sizes = [1, 128], strides = [1, 1]} : vector<8x128xf32> to vector<1x128xf32>
    %8 = vector.extract_strided_slice %1 {offsets = [0, 0], sizes = [1, 128], strides = [1, 1]} : vector<8x128xf32> to vector<1x128xf32>
    %9 = vector.broadcast %0 : vector<8x1xf32> to vector<8x128xf32>
    %10 = vector.broadcast %8 : vector<1x128xf32> to vector<8x128xf32>
    %11 = arith.mulf %9, %10 : vector<8x128xf32>
    %12 = vector.broadcast %2 : vector<1x128xf32> to vector<8x128xf32>
    %13 = arith.addf %11, %12 : vector<8x128xf32>
    %cst = arith.constant 0.000000e+00 : f32
    %14 = vector.broadcast %cst : f32 to vector<8x128xf32>
    %15 = arith.cmpf ogt, %13, %14 : vector<8x128xf32>
    %cst_3 = arith.constant 0.00999999977 : f32
    %16 = vector.broadcast %cst_3 : f32 to vector<8x128xf32>
    %17 = arith.mulf %16, %13 : vector<8x128xf32>
    %18 = arith.select %15, %13, %17 : vector<8x128xi1>, vector<8x128xf32>
    %c0_4 = arith.constant 0 : index
    %c0_5 = arith.constant 0 : index
    %c0_6 = arith.constant 0 : index
    %19 = vector.load %arg1[%c0_4, %c0_5, %c0_6] : memref<2x128x128xf32, #tpu.memory_space<vmem>>, vector<1x128x128xf32>
    %20 = vector.shape_cast %19 : vector<1x128x128xf32> to vector<128x128xf32>
    %cst_7 = arith.constant dense<0.000000e+00> : vector<8x128xf32>
    %21 = tpu.matmul %18, %20, %cst_7 {dimension_numbers = #tpu.dot_dimension_numbers<[1], [0], [0], [1], [0, 0, 1, 1], [], []>} : vector<8x128xf32>, vector<128x128xf32>, vector<8x128xf32> -> vector<8x128xf32>
    %22 = vector.broadcast %3 : vector<1x128xf32> to vector<8x128xf32>
    %23 = arith.addf %21, %22 : vector<8x128xf32>
    %cst_8 = arith.constant 0.000000e+00 : f32
    %24 = vector.broadcast %cst_8 : f32 to vector<8x128xf32>
    %25 = arith.cmpf ogt, %23, %24 : vector<8x128xf32>
    %cst_9 = arith.constant 0.00999999977 : f32
    %26 = vector.broadcast %cst_9 : f32 to vector<8x128xf32>
    %27 = arith.mulf %26, %23 : vector<8x128xf32>
    %28 = arith.select %25, %23, %27 : vector<8x128xi1>, vector<8x128xf32>
    %29 = vector.extract_strided_slice %28 {offsets = [0, 0], sizes = [8, 1], strides = [1, 1]} : vector<8x128xf32> to vector<8x1xf32>
    %30 = vector.shape_cast %29 : vector<8x1xf32> to vector<1x8x1xf32>
    %cst_10 = arith.constant dense<0.000000e+00> : vector<1xf32>
    %31 = vector.multi_reduction <add>, %30, %cst_10 [1, 2] : vector<1x8x1xf32> to vector<1xf32>
    %32 = vector.shape_cast %31 : vector<1xf32> to vector<1x1x1xf32>
    %33 = vector.extract %32[0, 0, 0] : f32 from vector<1x1x1xf32>
    %34 = vector.broadcast %33 : f32 to vector<1x1xf32>
    %cst_11 = arith.constant 8.000000e+00 : f32
    %35 = vector.broadcast %cst_11 : f32 to vector<1x1xf32>
    %36 = arith.divf %34, %35 : vector<1x1xf32>
    %37 = vector.broadcast %36 : vector<1x1xf32> to vector<8x1xf32>
    %38 = arith.subf %29, %37 : vector<8x1xf32>
    %39 = arith.mulf %38, %38 : vector<8x1xf32>
    %40 = vector.shape_cast %39 : vector<8x1xf32> to vector<1x8x1xf32>
    %cst_12 = arith.constant dense<0.000000e+00> : vector<1xf32>
    %41 = vector.multi_reduction <add>, %40, %cst_12 [1, 2] : vector<1x8x1xf32> to vector<1xf32>
    %42 = vector.shape_cast %41 : vector<1xf32> to vector<1x1x1xf32>
    %43 = vector.extract %42[0, 0, 0] : f32 from vector<1x1x1xf32>
    %44 = vector.broadcast %43 : f32 to vector<1x1xf32>
    %cst_13 = arith.constant 7.000000e+00 : f32
    %45 = vector.broadcast %cst_13 : f32 to vector<1x1xf32>
    %46 = arith.divf %44, %45 : vector<1x1xf32>
    %47 = math.sqrt %46 : vector<1x1xf32>
    %c1 = arith.constant 1 : index
    %c0_14 = arith.constant 0 : index
    %c0_15 = arith.constant 0 : index
    %48 = vector.load %arg1[%c1, %c0_14, %c0_15] : memref<2x128x128xf32, #tpu.memory_space<vmem>>, vector<1x128x128xf32>
    %49 = vector.shape_cast %48 : vector<1x128x128xf32> to vector<128x128xf32>
    %cst_16 = arith.constant dense<0.000000e+00> : vector<8x128xf32>
    %50 = tpu.matmul %28, %49, %cst_16 {dimension_numbers = #tpu.dot_dimension_numbers<[1], [0], [0], [1], [0, 0, 1, 1], [], []>} : vector<8x128xf32>, vector<128x128xf32>, vector<8x128xf32> -> vector<8x128xf32>
    %51 = vector.broadcast %47 : vector<1x1xf32> to vector<1x128xf32>
    %52 = arith.mulf %51, %4 : vector<1x128xf32>
    %53 = vector.broadcast %52 : vector<1x128xf32> to vector<8x128xf32>
    %54 = arith.addf %50, %53 : vector<8x128xf32>
    %55 = vector.broadcast %5 : vector<1x128xf32> to vector<8x128xf32>
    %56 = arith.addf %54, %55 : vector<8x128xf32>
    %cst_17 = arith.constant 0.000000e+00 : f32
    %57 = vector.broadcast %cst_17 : f32 to vector<8x128xf32>
    %58 = arith.cmpf ogt, %56, %57 : vector<8x128xf32>
    %cst_18 = arith.constant 0.00999999977 : f32
    %59 = vector.broadcast %cst_18 : f32 to vector<8x128xf32>
    %60 = arith.mulf %59, %56 : vector<8x128xf32>
    %61 = arith.select %58, %56, %60 : vector<8x128xi1>, vector<8x128xf32>
    %62 = vector.broadcast %6 : vector<1x128xf32> to vector<8x128xf32>
    %63 = arith.mulf %61, %62 : vector<8x128xf32>
    %cst_19 = arith.constant dense<0.000000e+00> : vector<8xf32>
    %64 = vector.multi_reduction <add>, %63, %cst_19 [1] : vector<8x128xf32> to vector<8xf32>
    %65 = vector.shape_cast %64 : vector<8xf32> to vector<8x1xf32>
    %66 = vector.broadcast %65 : vector<8x1xf32> to vector<8x128xf32>
    %67 = vector.broadcast %7 : vector<1x128xf32> to vector<8x128xf32>
    %68 = arith.addf %66, %67 : vector<8x128xf32>
    %c0_20 = arith.constant 0 : index
    %c0_21 = arith.constant 0 : index
    %69 = vector.load %arg3[%c0_20, %c0_21] : memref<8x128xf32, #tpu.memory_space<vmem>>, vector<8x128xf32>
    tpu.vector_store %arg3[%c0_20, %c0_21], %68 {strides = array<i32>} : memref<8x128xf32, #tpu.memory_space<vmem>>, vector<8x128xf32>,
    return
  }
}

</mosaic_0001>

<llo_original>
// kernel: batch_stat_discriminator.1
$region0: #{batch_stat_discriminator.1}
  #allocation0 [shape = 'u32[]', space=smem, size = 0x4, offset = 0x4, fixed_abs, tag = 'smem constant byte address 0x4 - core index']
  #allocation1 [shape = 'u32[144,128]{1,0:T(1,128)}', space=vmem, size = 0x12000, scoped, tag = 'internal scratch']
  %s0 = inlined_call_operand.vmem [shape: f32[8,1], index: 0, kind: input, shape index: {}]
  %s1 = inlined_call_operand.hbm [shape: f32[2,128,128], index: 1, kind: input, shape index: {}]
  %s2 = inlined_call_operand.vmem [shape: f32[8,128], index: 2, kind: input, shape index: {}]
  %s3 = inlined_call_operand.vmem [shape: f32[8,128], index: 3, kind: output, shape index: {}]
  %s4 = sld [smem:[#allocation0]]
  $region26: #{batch_stat_discriminator.1} parent=0
    _
  %s6 = ssub.s32 1, %s4
  %s7 = scalar_select 0, %s6, %s4
  $region1: #{batch_stat_discriminator.1} parent=0
    #allocation2 [shape = 'u8[131072]{0}', space=vmem, size = 0x20000, scoped, tag = 'input window, operand 1, single buffered']
    #allocation3 [shape = 's32[1]{0}', space=sflag, size = 0x4, scoped, tag = 'scoped memory for batch_stat_discriminator.1']
    %8 = vsyncpa [#allocation3], 0
    // Predicated region
    $region2: #{batch_stat_discriminator.1} parent=1 // pred_check
      _
    $region3: #{batch_stat_discriminator.1} parent=1 // pred_check_branch
      %10 = sbr.rel (0) target = $region5
    $region4: #{batch_stat_discriminator.1} parent=1 // pred_region
      _
    $region5: #{batch_stat_discriminator.1} parent=1 // pred_fallthru
      _
    // Predicated region
    $region6: #{batch_stat_discriminator.1} parent=1 // pred_check
      _
    $region7: #{batch_stat_discriminator.1} parent=1 // pred_check_branch
      %12 = sbr.rel (0) target = $region9
    $region8: #{batch_stat_discriminator.1} parent=1 // pred_region
      %s14 = ssub.s32 4096, 4096
      %15 = vsyncadd [#allocation3], %s14
      %s16 = sshll.u32 [#allocation2], 4
      %s17 = int_to_ptr.vmem [resolvable:$true] %s16
      %22 = dma.hbm_to_vmem [thread:$0]  %s1, 4096, %s17, [#allocation3], 128, 128, 8
    $region9: #{batch_stat_discriminator.1} parent=1 // pred_fallthru
      _
    // Predicated region
    $region10: #{batch_stat_discriminator.1} parent=1 // pred_check
      _
    $region11: #{batch_stat_discriminator.1} parent=1 // pred_check_branch
      %24 = sbr.rel (0) target = $region13
    $region12: #{batch_stat_discriminator.1} parent=1 // pred_region
      _
    $region13: #{batch_stat_discriminator.1} parent=1 // pred_fallthru
      _
    // Predicated region
    $region14: #{batch_stat_discriminator.1} parent=1 // pred_check
      _
    $region15: #{batch_stat_discriminator.1} parent=1 // pred_check_branch
      %26 = sbr.rel (0) target = $region17
    $region16: #{batch_stat_discriminator.1} parent=1 // pred_region
      %27 = dma.done [#allocation3], 4096
    $region17: #{batch_stat_discriminator.1} parent=1 // pred_fallthru
      _
    %v28 = vld [vmem:[%s0] sm:$0xff]
    %v29 = vld [vmem:[%s2] sm:$0xff]
    %31 = vset.pattern.permute.xlu0 0
    %32 = vperm.xlu0 %31, %v28
    %v33 = vpop.permute.xlu0 %32
    %v35 = vlaneseq
    %v36 = vshrl.u32 %v35, 7
    %v37 = vsub.s32 0, %v36
    %v38 = vrot.slane %v29, %v37
    %v39 = vmul.f32 %v33, %v38
    %v40 = vlaneseq
    %v41 = vshrl.u32 %v40, 7
    %v42 = vsub.s32 1, %v41
    %v43 = vrot.slane %v29, %v42
    %v44 = vadd.f32 %v39, %v43
    %vm45 = vcmp.gt.f32.partialorder %v44, 0.0
    %v46 = vmul.f32 %v44, 0.01
    %v47 = vsel %vm45, %v44, %v46
    %v48 = vld [vmem:[#allocation2] sm:$0xff]
    %v49 = vld [vmem:[#allocation2 + $0x8] sm:$0xff]
    %v50 = vld [vmem:[#allocation2 + $0x10] sm:$0xff]
    %v51 = vld [vmem:[#allocation2 + $0x18] sm:$0xff]
    %v52 = vld [vmem:[#allocation2 + $0x20] sm:$0xff]
    %v53 = vld [vmem:[#allocation2 + $0x28] sm:$0xff]
    %v54 = vld [vmem:[#allocation2 + $0x30] sm:$0xff]
    %v55 = vld [vmem:[#allocation2 + $0x38] sm:$0xff]
    %v56 = vld [vmem:[#allocation2 + $0x40] sm:$0xff]
    %v57 = vld [vmem:[#allocation2 + $0x48] sm:$0xff]
    %v58 = vld [vmem:[#allocation2 + $0x50] sm:$0xff]
    %v59 = vld [vmem:[#allocation2 + $0x58] sm:$0xff]
    %v60 = vld [vmem:[#allocation2 + $0x60] sm:$0xff]
    %v61 = vld [vmem:[#allocation2 + $0x68] sm:$0xff]
    %v62 = vld [vmem:[#allocation2 + $0x70] sm:$0xff]
    %v63 = vld [vmem:[#allocation2 + $0x78] sm:$0xff]
    %v64 = vlaneseq
    %v65 = vshrl.u32 %v64, 7
    %v66 = vsub.s32 2, %v65
    %v67 = vrot.slane %v29, %v66
    %68 = vmatprep.subr.mxu0 0.0
    %69 = vmatpush1.msra.mxu0 %v48
    %70 = vmatprep.subr.mxu0 0.0
    %71 = vmatpush1.msra.mxu0 %v49
    %72 = vmatprep.subr.mxu0 0.0
    %73 = vmatpush1.msra.mxu0 %v50
    %74 = vmatprep.subr.mxu0 0.0
    %75 = vmatpush1.msra.mxu0 %v51
    %76 = vmatprep.subr.mxu0 0.0
    %77 = vmatpush1.msra.mxu0 %v52
    %78 = vmatprep.subr.mxu0 0.0
    %79 = vmatpush1.msra.mxu0 %v53
    %80 = vmatprep.subr.mxu0 0.0
    %81 = vmatpush1.msra.mxu0 %v54
    %82 = vmatprep.subr.mxu0 0.0
    %83 = vmatpush1.msra.mxu0 %v55
    %84 = vmatprep.subr.mxu0 0.0
    %85 = vmatpush1.msra.mxu0 %v56
    %86 = vmatprep.subr.mxu0 0.0
    %87 = vmatpush1.msra.mxu0 %v57
    %88 = vmatprep.subr.mxu0 0.0
    %89 = vmatpush1.msra.mxu0 %v58
    %90 = vmatprep.subr.mxu0 0.0
    %91 = vmatpush1.msra.mxu0 %v59
    %92 = vmatprep.subr.mxu0 0.0
    %93 = vmatpush1.msra.mxu0 %v60
    %94 = vmatprep.subr.mxu0 0.0
    %95 = vmatpush1.msra.mxu0 %v61
    %96 = vmatprep.subr.mxu0 0.0
    %97 = vmatpush1.msra.mxu0 %v62
    %98 = vmatprep.subr.mxu0 0.0
    %99 = vmatpush1.msra.mxu0 %v63
    %100 = vmatprep.subr.mxu0 0.0
    %101 = vmatpush1.msra.mxu0 0.0
    %102 = vmatprep.subr.mxu0 0.0
    %103 = vmatpush1.msra.mxu0 0.0
    %104 = vmatprep.subr.mxu0 0.0
    %105 = vmatpush1.msra.mxu0 0.0
    %106 = vmatprep.subr.mxu0 0.0
    %107 = vmatpush1.msra.mxu0 0.0
    %108 = vmatprep.subr.mxu0 0.0
    %109 = vmatpush1.msra.mxu0 0.0
    %110 = vmatprep.subr.mxu0 0.0
    %111 = vmatpush1.msra.mxu0 0.0
    %112 = vmatprep.subr.mxu0 0.0
    %113 = vmatpush1.msra.mxu0 0.0
    %114 = vmatprep.subr.mxu0 0.0
    %115 = vmatpush1.msra.mxu0 0.0
    %116 = vmatprep.subr.mxu0 0.0
    %117 = vmatpush1.msra.mxu0 0.0
    %118 = vmatprep.subr.mxu0 0.0
    %119 = vmatpush1.msra.mxu0 0.0
    %120 = vmatprep.subr.mxu0 0.0
    %121 = vmatpush1.msra.mxu0 0.0
    %122 = vmatprep.subr.mxu0 0.0
    %123 = vmatpush1.msra.mxu0 0.0
    %124 = vmatprep.subr.mxu0 0.0
    %125 = vmatpush1.msra.mxu0 0.0
    %126 = vmatprep.subr.mxu0 0.0
    %127 = vmatpush1.msra.mxu0 0.0
    %128 = vmatprep.subr.mxu0 0.0
    %129 = vmatpush1.msra.mxu0 0.0
    %130 = vmatprep.subr.mxu0 0.0
    %131 = vmatpush1.msra.mxu0 0.0
    %132 = vmatprep.mubr.f32.mxu0 0.0
    %133 = vmatmul.mubr.f32.gmra.mrb[0].mxu0 %v47
    %v134 = vpop.f32.mrb[0].mxu0
    %v135 = vadd.f32 %v67, %v134
    %v136 = vpop.f32.mrb[0].mxu0
    %137 = vdwg.mxu0
    %vm138 = vcmp.gt.f32.partialorder %v135, 0.0
    %v139 = vmul.f32 %v135, 0.01
    %v140 = vsel %vm138, %v135, %v139
    %vm141 = vcmask 7168
    %v142 = vsel %vm141, %v140, 0.0
    %143 = vadd.xlane.f32.xlu0 %v142
    %v144 = vpop.xlane.xlu0 %143
    %v145 = vrot.slane %v144, 4
    %v146 = vadd.f32 %v144, %v145
    %v147 = vrot.slane %v146, 2
    %v148 = vadd.f32 %v146, %v147
    %v149 = vrot.slane %v148, 1
    %v150 = vadd.f32 %v148, %v149
    %s151 = vtos %v150
    %v152 = vstv %s151
    %v153 = vrcp.pop 8.0
    %v154 = vmul.f32 %v152, %v153
    %v155 = vsub.f32 %v140, %v154
    %v156 = vmul.f32 %v155, %v155
    %v157 = vsel %vm141, %v156, 0.0
    %158 = vadd.xlane.f32.xlu0 %v157
    %v159 = vpop.xlane.xlu0 %158
    %v160 = vrot.slane %v159, 4
    %v161 = vadd.f32 %v159, %v160
    %v162 = vrot.slane %v161, 2
    %v163 = vadd.f32 %v161, %v162
    %v164 = vrot.slane %v163, 1
    %v165 = vadd.f32 %v163, %v164
    %s166 = vtos %v165
    %v167 = vstv %s166
    %v168 = vrcp.pop 7.0
    %v169 = vmul.f32 %v167, %v168
    %v170 = vrsqrt.pop %v169
    %v171 = vmul.f32 %v169, %v170
    %vm172 = vcmp.eq.f32.partialorder %v169, inf
    %v173 = vsel %vm172, %v169, %v171
    %vm174 = vcmp.eq.f32.partialorder %v169, 0.0
    %v175 = vand.u32 %v169, 2147483648
    %v176 = vsel %vm174, %v175, %v173
    %s177 = scalar_lea.vmem [#allocation2], 128
    %v178 = vld [vmem:[%s177] sm:$0xff]
    %v179 = vld [vmem:[%s177 + $0x8] sm:$0xff]
    %v180 = vld [vmem:[%s177 + $0x10] sm:$0xff]
    %v181 = vld [vmem:[%s177 + $0x18] sm:$0xff]
    %v182 = vld [vmem:[%s177 + $0x20] sm:$0xff]
    %v183 = vld [vmem:[%s177 + $0x28] sm:$0xff]
    %v184 = vld [vmem:[%s177 + $0x30] sm:$0xff]
    %v185 = vld [vmem:[%s177 + $0x38] sm:$0xff]
    %v186 = vld [vmem:[%s177 + $0x40] sm:$0xff]
    %v187 = vld [vmem:[%s177 + $0x48] sm:$0xff]
    %v188 = vld [vmem:[%s177 + $0x50] sm:$0xff]
    %v189 = vld [vmem:[%s177 + $0x58] sm:$0xff]
    %v190 = vld [vmem:[%s177 + $0x60] sm:$0xff]
    %v191 = vld [vmem:[%s177 + $0x68] sm:$0xff]
    %v192 = vld [vmem:[%s177 + $0x70] sm:$0xff]
    %v193 = vld [vmem:[%s177 + $0x78] sm:$0xff]
    %v194 = vmul.f32 %v176, %v29
    %v195 = vlaneseq
    %v196 = vshrl.u32 %v195, 7
    %v197 = vsub.s32 3, %v196
    %v198 = vrot.slane %v194, %v197
    %199 = vmatprep.subr.mxu0 0.0
    %200 = vmatpush1.msra.mxu0 %v178
    %201 = vmatprep.subr.mxu0 0.0
    %202 = vmatpush1.msra.mxu0 %v179
    %203 = vmatprep.subr.mxu0 0.0
    %204 = vmatpush1.msra.mxu0 %v180
    %205 = vmatprep.subr.mxu0 0.0
    %206 = vmatpush1.msra.mxu0 %v181
    %207 = vmatprep.subr.mxu0 0.0
    %208 = vmatpush1.msra.mxu0 %v182
    %209 = vmatprep.subr.mxu0 0.0
    %210 = vmatpush1.msra.mxu0 %v183
    %211 = vmatprep.subr.mxu0 0.0
    %212 = vmatpush1.msra.mxu0 %v184
    %213 = vmatprep.subr.mxu0 0.0
    %214 = vmatpush1.msra.mxu0 %v185
    %215 = vmatprep.subr.mxu0 0.0
    %216 = vmatpush1.msra.mxu0 %v186
    %217 = vmatprep.subr.mxu0 0.0
    %218 = vmatpush1.msra.mxu0 %v187
    %219 = vmatprep.subr.mxu0 0.0
    %220 = vmatpush1.msra.mxu0 %v188
    %221 = vmatprep.subr.mxu0 0.0
    %222 = vmatpush1.msra.mxu0 %v189
    %223 = vmatprep.subr.mxu0 0.0
    %224 = vmatpush1.msra.mxu0 %v190
    %225 = vmatprep.subr.mxu0 0.0
    %226 = vmatpush1.msra.mxu0 %v191
    %227 = vmatprep.subr.mxu0 0.0
    %228 = vmatpush1.msra.mxu0 %v192
    %229 = vmatprep.subr.mxu0 0.0
    %230 = vmatpush1.msra.mxu0 %v193
    %231 = vmatprep.subr.mxu0 0.0
    %232 = vmatpush1.msra.mxu0 0.0
    %233 = vmatprep.subr.mxu0 0.0
    %234 = vmatpush1.msra.mxu0 0.0
    %235 = vmatprep.subr.mxu0 0.0
    %236 = vmatpush1.msra.mxu0 0.0
    %237 = vmatprep.subr.mxu0 0.0
    %238 = vmatpush1.msra.mxu0 0.0
    %239 = vmatprep.subr.mxu0 0.0
    %240 = vmatpush1.msra.mxu0 0.0
    %241 = vmatprep.subr.mxu0 0.0
    %242 = vmatpush1.msra.mxu0 0.0
    %243 = vmatprep.subr.mxu0 0.0
    %244 = vmatpush1.msra.mxu0 0.0
    %245 = vmatprep.subr.mxu0 0.0
    %246 = vmatpush1.msra.mxu0 0.0
    %247 = vmatprep.subr.mxu0 0.0
    %248 = vmatpush1.msra.mxu0 0.0
    %249 = vmatprep.subr.mxu0 0.0
    %250 = vmatpush1.msra.mxu0 0.0
    %251 = vmatprep.subr.mxu0 0.0
    %252 = vmatpush1.msra.mxu0 0.0
    %253 = vmatprep.subr.mxu0 0.0
    %254 = vmatpush1.msra.mxu0 0.0
    %255 = vmatprep.subr.mxu0 0.0
    %256 = vmatpush1.msra.mxu0 0.0
    %257 = vmatprep.subr.mxu0 0.0
    %258 = vmatpush1.msra.mxu0 0.0
    %259 = vmatprep.subr.mxu0 0.0
    %260 = vmatpush1.msra.mxu0 0.0
    %261 = vmatprep.subr.mxu0 0.0
    %262 = vmatpush1.msra.mxu0 0.0
    %263 = vmatprep.mubr.f32.mxu0 0.0
    %264 = vmatmul.mubr.f32.gmra.mrb[0].mxu0 %v140
    %v265 = vpop.f32.mrb[0].mxu0
    %v266 = vadd.f32 %v198, %v265
    %v267 = vpop.f32.mrb[0].mxu0
    %268 = vdwg.mxu0
    %v269 = vlaneseq
    %v270 = vshrl.u32 %v269, 7
    %v271 = vsub.s32 4, %v270
    %v272 = vrot.slane %v29, %v271
    %v273 = vadd.f32 %v266, %v272
    %vm274 = vcmp.gt.f32.partialorder %v273, 0.0
    %v275 = vmul.f32 %v273, 0.01
    %v276 = vsel %vm274, %v273, %v275
    %v277 = vlaneseq
    %v278 = vshrl.u32 %v277, 7
    %v279 = vsub.s32 5, %v278
    %v280 = vrot.slane %v29, %v279
    %v281 = vmul.f32 %v276, %v280
    %282 = vadd.xlane.f32.xlu0 %v281
    %v283 = vpop.xlane.xlu0 %282
    %v284 = vlaneseq
    %v285 = vshrl.u32 %v284, 7
    %v286 = vsub.s32 6, %v285
    %v287 = vrot.slane %v29, %v286
    %v288 = vadd.f32 %v283, %v287
    %289 = vst [vmem:[%s3] sm:$0xff] %v288
    // Predicated region
    $region18: #{batch_stat_discriminator.1} parent=1 // pred_check
      _
    $region19: #{batch_stat_discriminator.1} parent=1 // pred_check_branch
      %291 = sbr.rel (0) target = $region21
    $region20: #{batch_stat_discriminator.1} parent=1 // pred_region
      _
    $region21: #{batch_stat_discriminator.1} parent=1 // pred_fallthru
      _
    // Predicated region
    $region22: #{batch_stat_discriminator.1} parent=1 // pred_check
      _
    $region23: #{batch_stat_discriminator.1} parent=1 // pred_check_branch
      %293 = sbr.rel (0) target = $region25
    $region24: #{batch_stat_discriminator.1} parent=1 // pred_region
      _
    $region25: #{batch_stat_discriminator.1} parent=1 // pred_fallthru
      _
    %294 = vsyncpa [#allocation3], 1

</llo_original>
